<compile_context>
chip_gen: v5e
topology: v5e:2x2
jax: 0.10.0
libtpu: 0.0.40
codegen_flags: <defaults>
</compile_context>

<pallas_src>
import jax
import jax.numpy as jnp
from jax.experimental import pallas as pl
from jax.experimental.pallas import tpu as pltpu

INPUT_DIM = 32
HIDDEN_DIM = 32
OUTPUT_DIM = 16

SUBLANE = 8      # f32 sublane count (row-tile granularity)
TM_MAX = 2048    # row-tile sweet spot (per-step overhead amortized, VMEM-safe)


def _round_up(n, m):
    return ((n + m - 1) // m) * m


def _cdiv(a, b):
    return -(-a // b)


# ----------------------------- fused kernel ---------------------------------
def _mlp_kernel(x_ref, w1_ref, b1_ref, w2_ref, b2_ref, w3_ref, b3_ref, o_ref):
    """layer1 -> relu -> layer2 -> relu -> layer3, all in VMEM/vregs."""
    h = jnp.dot(x_ref[...], w1_ref[...],
                preferred_element_type=jnp.float32) + b1_ref[...]
    h = jnp.maximum(h, 0.0)
    h = jnp.dot(h, w2_ref[...],
                preferred_element_type=jnp.float32) + b2_ref[...]
    h = jnp.maximum(h, 0.0)
    o_ref[...] = (jnp.dot(h, w3_ref[...],
                          preferred_element_type=jnp.float32)
                  + b3_ref[...]).astype(o_ref.dtype)


# --------------------------- one-time weight prepack --------------------------
def prepack_params(params):
    """Hoisted out of the forward path: f32 cast + (1, N) bias reshape."""
    f32 = lambda a: jnp.asarray(a, jnp.float32)
    return dict(
        w1=f32(params["w1"]), b1=f32(params["b1"]).reshape(1, -1),
        w2=f32(params["w2"]), b2=f32(params["b2"]).reshape(1, -1),
        w3=f32(params["w3"]), b3=f32(params["b3"]).reshape(1, -1),
    )


def _choose_tm(M):
    """Row tile: as large as useful, multiple of 8, >=2 grid steps when M allows."""
    if M <= SUBLANE:
        return SUBLANE
    tm = _round_up(_cdiv(M, 2), SUBLANE)   # >= 2 grid steps -> both v7x TCs busy
    return min(tm, TM_MAX)


# ------------------------------- wrapper -------------------------------------
def mlp_forward(x, p):
    """Applies the MLP to the last dim of x (any leading batch dims).

    `p` must be the output of prepack_params (f32 weights, (1, N) biases).
    """
    orig_shape = x.shape
    K = orig_shape[-1]
    x2d = x.reshape(-1, K).astype(jnp.float32)
    M = x2d.shape[0]

    H = p["w1"].shape[1]
    O = p["w3"].shape[1]

    tm = _choose_tm(M)
    grid = (_cdiv(M, tm),)   # ragged tail (if any) masked by Pallas block clipping

    out = pl.pallas_call(
        _mlp_kernel,
        out_shape=jax.ShapeDtypeStruct((M, O), jnp.float32),
        grid=grid,
        in_specs=[
            pl.BlockSpec((tm, K), lambda i: (i, 0)),   # x rows (tiled over M)
            pl.BlockSpec((K, H), lambda i: (0, 0)),    # w1 (VMEM-resident)
            pl.BlockSpec((1, H), lambda i: (0, 0)),    # b1
            pl.BlockSpec((H, H), lambda i: (0, 0)),    # w2
            pl.BlockSpec((1, H), lambda i: (0, 0)),    # b2
            pl.BlockSpec((H, O), lambda i: (0, 0)),    # w3 (narrow output kept)
            pl.BlockSpec((1, O), lambda i: (0, 0)),    # b3
        ],
        out_specs=pl.BlockSpec((tm, O), lambda i: (i, 0)),
        compiler_params=pltpu.CompilerParams(
            dimension_semantics=("parallel",)),
    )(x2d, p["w1"], p["b1"], p["w2"], p["b2"], p["w3"], p["b3"])

    return out.reshape(*orig_shape[:-1], O)


# ----------------------------- pure-JAX reference ----------------------------
def _ref_forward(x, params):
    h = jnp.maximum(x @ params["w1"] + params["b1"], 0.0)
    h = jnp.maximum(h @ params["w2"] + params["b2"], 0.0)
    return h @ params["w3"] + params["b3"]


# ------------------------------ params init ----------------------------------
def init_params(key):
    k1, k2, k3, k4, k5, k6 = jax.random.split(key, 6)
    nrm = lambda k, s: 0.1 * jax.random.normal(k, s, jnp.float32)
    return dict(
        w1=nrm(k1, (INPUT_DIM, HIDDEN_DIM)),
        b1=nrm(k2, (HIDDEN_DIM,)),
        w2=nrm(k3, (HIDDEN_DIM, HIDDEN_DIM)),
        b2=nrm(k4, (HIDDEN_DIM,)),
        w3=nrm(k5, (HIDDEN_DIM, OUTPUT_DIM)),
        b3=nrm(k6, (OUTPUT_DIM,)),
    )


# --------------------------------- main ---------------------------------------
if __name__ == "__main__":
    key = jax.random.PRNGKey(0)
    pkey, xkey = jax.random.split(key)
    params = init_params(pkey)
    packed = prepack_params(params)   # one-time prepack, outside the hot path

    # batch=2, seq=8 query slots, input_dim=32 (DETR-style MLP head input)
    x = jax.random.normal(xkey, (2, 8, INPUT_DIM), jnp.float32)

    fwd = jax.jit(mlp_forward)
    out = fwd(x, packed)
    jax.block_until_ready(out)

    ref = _ref_forward(x, params)
    assert out.shape == (2, 8, OUTPUT_DIM)
    assert bool(jnp.all(jnp.isfinite(out)))
    assert bool(jnp.allclose(out, ref, atol=1e-5, rtol=1e-5))
    print("KERNEL_OK")
</pallas_src>

<mosaic_0001>
module attributes {stable_mosaic.version = 11 : i64} {
  func.func @_mlp_kernel(%arg0: i32, %arg1: memref<8x32xf32, #tpu.memory_space<vmem>>, %arg2: memref<32x32xf32, #tpu.memory_space<vmem>>, %arg3: memref<1x32xf32, #tpu.memory_space<vmem>>, %arg4: memref<32x32xf32, #tpu.memory_space<vmem>>, %arg5: memref<1x32xf32, #tpu.memory_space<vmem>>, %arg6: memref<32x16xf32, #tpu.memory_space<vmem>>, %arg7: memref<1x16xf32, #tpu.memory_space<vmem>>, %arg8: memref<8x16xf32, #tpu.memory_space<vmem>>) attributes {dimension_semantics = [#tpu.dimension_semantics<parallel>], iteration_bounds = array<i64: 2>, scalar_prefetch = 0 : i64, scratch_operands = 0 : i64, tpu.core_type = #tpu.core_type<tc>, window_params = [{transform_indices = @transform_0, window_bounds = array<i64: 8, 32>}, {pipeline_mode = #tpu.pipeline_mode<synchronous>, transform_indices = @transform_1, window_bounds = array<i64: 32, 32>}, {pipeline_mode = #tpu.pipeline_mode<synchronous>, transform_indices = @transform_2, window_bounds = array<i64: 1, 32>}, {pipeline_mode = #tpu.pipeline_mode<synchronous>, transform_indices = @transform_3, window_bounds = array<i64: 32, 32>}, {pipeline_mode = #tpu.pipeline_mode<synchronous>, transform_indices = @transform_4, window_bounds = array<i64: 1, 32>}, {pipeline_mode = #tpu.pipeline_mode<synchronous>, transform_indices = @transform_5, window_bounds = array<i64: 32, 16>}, {pipeline_mode = #tpu.pipeline_mode<synchronous>, transform_indices = @transform_6, window_bounds = array<i64: 1, 16>}, {transform_indices = @transform_7, window_bounds = array<i64: 8, 16>}]} {
    %c0 = arith.constant 0 : index
    %c0_0 = arith.constant 0 : index
    %0 = vector.load %arg1[%c0, %c0_0] : memref<8x32xf32, #tpu.memory_space<vmem>>, vector<8x32xf32>
    %c0_1 = arith.constant 0 : index
    %c0_2 = arith.constant 0 : index
    %1 = vector.load %arg2[%c0_1, %c0_2] : memref<32x32xf32, #tpu.memory_space<vmem>>, vector<32x32xf32>
    %cst = arith.constant dense<0.000000e+00> : vector<8x32xf32>
    %2 = tpu.matmul %0, %1, %cst {dimension_numbers = #tpu.dot_dimension_numbers<[1], [0], [0], [1], [0, 0, 1, 1], [], []>} : vector<8x32xf32>, vector<32x32xf32>, vector<8x32xf32> -> vector<8x32xf32>
    %c0_3 = arith.constant 0 : index
    %c0_4 = arith.constant 0 : index
    %3 = vector.load %arg3[%c0_3, %c0_4] : memref<1x32xf32, #tpu.memory_space<vmem>>, vector<1x32xf32>
    %4 = vector.broadcast %3 : vector<1x32xf32> to vector<8x32xf32>
    %5 = arith.addf %2, %4 : vector<8x32xf32>
    %cst_5 = arith.constant 0.000000e+00 : f32
    %6 = vector.broadcast %cst_5 : f32 to vector<8x32xf32>
    %7 = arith.maximumf %5, %6 : vector<8x32xf32>
    %c0_6 = arith.constant 0 : index
    %c0_7 = arith.constant 0 : index
    %8 = vector.load %arg4[%c0_6, %c0_7] : memref<32x32xf32, #tpu.memory_space<vmem>>, vector<32x32xf32>
    %cst_8 = arith.constant dense<0.000000e+00> : vector<8x32xf32>
    %9 = tpu.matmul %7, %8, %cst_8 {dimension_numbers = #tpu.dot_dimension_numbers<[1], [0], [0], [1], [0, 0, 1, 1], [], []>} : vector<8x32xf32>, vector<32x32xf32>, vector<8x32xf32> -> vector<8x32xf32>
    %c0_9 = arith.constant 0 : index
    %c0_10 = arith.constant 0 : index
    %10 = vector.load %arg5[%c0_9, %c0_10] : memref<1x32xf32, #tpu.memory_space<vmem>>, vector<1x32xf32>
    %11 = vector.broadcast %10 : vector<1x32xf32> to vector<8x32xf32>
    %12 = arith.addf %9, %11 : vector<8x32xf32>
    %cst_11 = arith.constant 0.000000e+00 : f32
    %13 = vector.broadcast %cst_11 : f32 to vector<8x32xf32>
    %14 = arith.maximumf %12, %13 : vector<8x32xf32>
    %c0_12 = arith.constant 0 : index
    %c0_13 = arith.constant 0 : index
    %15 = vector.load %arg6[%c0_12, %c0_13] : memref<32x16xf32, #tpu.memory_space<vmem>>, vector<32x16xf32>
    %cst_14 = arith.constant dense<0.000000e+00> : vector<8x16xf32>
    %16 = tpu.matmul %14, %15, %cst_14 {dimension_numbers = #tpu.dot_dimension_numbers<[1], [0], [0], [1], [0, 0, 1, 1], [], []>} : vector<8x32xf32>, vector<32x16xf32>, vector<8x16xf32> -> vector<8x16xf32>
    %c0_15 = arith.constant 0 : index
    %c0_16 = arith.constant 0 : index
    %17 = vector.load %arg7[%c0_15, %c0_16] : memref<1x16xf32, #tpu.memory_space<vmem>>, vector<1x16xf32>
    %18 = vector.broadcast %17 : vector<1x16xf32> to vector<8x16xf32>
    %19 = arith.addf %16, %18 : vector<8x16xf32>
    %c0_17 = arith.constant 0 : index
    %c0_18 = arith.constant 0 : index
    %20 = vector.load %arg8[%c0_17, %c0_18] : memref<8x16xf32, #tpu.memory_space<vmem>>, vector<8x16xf32>
    tpu.vector_store %arg8[%c0_17, %c0_18], %19 {strides = array<i32>} : memref<8x16xf32, #tpu.memory_space<vmem>>, vector<8x16xf32>,
    return
  }
  func.func @transform_0(%arg0: i32) -> (i32, i32) {
    %c0_i32 = arith.constant 0 : i32
    %c0_i32_0 = arith.constant 0 : i32
    return %arg0, %c0_i32 : i32, i32
  }
  func.func @transform_1(%arg0: i32) -> (i32, i32) {
    %c0_i32 = arith.constant 0 : i32
    %c0_i32_0 = arith.constant 0 : i32
    %c0_i32_1 = arith.constant 0 : i32
    return %c0_i32, %c0_i32_0 : i32, i32
  }
  func.func @transform_2(%arg0: i32) -> (i32, i32) {
    %c0_i32 = arith.constant 0 : i32
    %c0_i32_0 = arith.constant 0 : i32
    %c0_i32_1 = arith.constant 0 : i32
    return %c0_i32, %c0_i32_0 : i32, i32
  }
  func.func @transform_3(%arg0: i32) -> (i32, i32) {
    %c0_i32 = arith.constant 0 : i32
    %c0_i32_0 = arith.constant 0 : i32
    %c0_i32_1 = arith.constant 0 : i32
    return %c0_i32, %c0_i32_0 : i32, i32
  }
  func.func @transform_4(%arg0: i32) -> (i32, i32) {
    %c0_i32 = arith.constant 0 : i32
    %c0_i32_0 = arith.constant 0 : i32
    %c0_i32_1 = arith.constant 0 : i32
    return %c0_i32, %c0_i32_0 : i32, i32
  }
  func.func @transform_5(%arg0: i32) -> (i32, i32) {
    %c0_i32 = arith.constant 0 : i32
    %c0_i32_0 = arith.constant 0 : i32
    %c0_i32_1 = arith.constant 0 : i32
    return %c0_i32, %c0_i32_0 : i32, i32
  }
  func.func @transform_6(%arg0: i32) -> (i32, i32) {
    %c0_i32 = arith.constant 0 : i32
    %c0_i32_0 = arith.constant 0 : i32
    %c0_i32_1 = arith.constant 0 : i32
    return %c0_i32, %c0_i32_0 : i32, i32
  }
  func.func @transform_7(%arg0: i32) -> (i32, i32) {
    %c0_i32 = arith.constant 0 : i32
    %c0_i32_0 = arith.constant 0 : i32
    return %arg0, %c0_i32 : i32, i32
  }
}

</mosaic_0001>

<llo_original>
// kernel: mlp_forward.1
$region0: #{mlp_forward.1}
  #allocation0 [shape = 'u32[]', space=smem, size = 0x4, offset = 0x4, fixed_abs, tag = 'smem constant byte address 0x4 - core index']
  #allocation1 [shape = 'u32[72,128]{1,0:T(1,128)}', space=vmem, size = 0x9000, scoped, tag = 'internal scratch']
  %s0 = inlined_call_operand.vmem [shape: f32[16,32], index: 0, kind: input, shape index: {}]
  %s1 = inlined_call_operand.vmem [shape: f32[32,32], index: 1, kind: input, shape index: {}]
  %s2 = inlined_call_operand.vmem [shape: f32[1,32], index: 2, kind: input, shape index: {}]
  %s3 = inlined_call_operand.hbm [shape: f32[32,32], index: 3, kind: input, shape index: {}]
  %s4 = inlined_call_operand.vmem [shape: f32[1,32], index: 4, kind: input, shape index: {}]
  %s5 = inlined_call_operand.vmem [shape: f32[32,16], index: 5, kind: input, shape index: {}]
  %s6 = inlined_call_operand.vmem [shape: f32[1,16], index: 6, kind: input, shape index: {}]
  %s7 = inlined_call_operand.hbm [shape: f32[16,16], index: 7, kind: output, shape index: {}]
  %s8 = sld [smem:[#allocation0]]
  $region65: #{mlp_forward.1} parent=0
    _
  %s10 = ssub.s32 1, %s8
  %s11 = scalar_select 0, %s10, %s8
  $region1: #{mlp_forward.1} parent=0
    #allocation2 [shape = 'u8[16384]{0}', space=vmem, size = 0x4000, scoped, tag = 'input window, operand 3, single buffered']
    #allocation3 [shape = 's32[2]{0}', space=sflag, size = 0x8, scoped, tag = 'scoped memory for mlp_forward.1']
    #allocation4 [shape = 's32[2]{0}', space=sflag, size = 0x8, scoped, tag = 'scoped memory for mlp_forward.1']
    #allocation5 [shape = 'u8[8192]{0}', space=vmem, size = 0x2000, scoped, tag = 'output window, operand 0']
    %12 = vsyncpa [#allocation3], 0
    %13 = vsyncpa [#allocation4], 0
    %s14 = scalar_lea.sflag [#allocation4], 1
    %15 = vsyncpa %s14, 0
    loop: start=0, step=1, limit=4
    $region2: #{mlp_forward.1} parent=1 // loop_pre_header
      _
    $region3: #{mlp_forward.1} parent=1 // loop_header
      %s17 = sphi 0, %s21
      %p18 = scmp.ge.s32.totalorder %s17, 4
      %s27 = sphi 0, %s29
      %s30 = sphi 0, %s27
      %s31 = sphi 0, %s30
      %s47 = sphi 0, %s31
      %s51 = sphi 0, %s51
      %s53 = sphi 0, %s51
      %s54 = sphi 0, %s53
      %s68 = sphi 0, %s54
      %s72 = sphi 0, %s72
      %s74 = sphi 0, %s72
      %s75 = sphi 0, %s74
      %s89 = sphi 0, %s75
      %s93 = sphi 0, %s93
      %s95 = sphi 0, %s93
      %s96 = sphi 0, %s95
      %s110 = sphi 0, %s96
      %s114 = sphi 0, %s114
      %s116 = sphi 0, %s114
      %s117 = sphi 0, %s116
      %s131 = sphi 0, %s117
      %s135 = sphi 0, %s135
      %s137 = sphi 0, %s135
      %s138 = sphi 0, %s137
      %s152 = sphi 0, %s138
      %s156 = sphi 0, %s156
      %s158 = sphi 0, %s156
      %s159 = sphi 0, %s158
      %s173 = sphi 0, %s159
      %s179 = sphi 0, %s181
      %s182 = sphi 0, %s179
      %s183 = sphi 0, %s182
      %s199 = sphi 0, %s183
    $region4: #{mlp_forward.1} parent=1 // loop_header_branch
      %20 = sbr.rel (%p18) target = $region8
    $region5: #{mlp_forward.1} parent=1 // loop_body
      %s22 = ssub.s32 %s17, 1
      %s23 = ssub.s32 %s17, 2
      %s24 = sadd.s32 %s17, 1
      %s25 = ssub.s32 %s17, %s24
      %p26 = scmp.eq.s32.totalorder %s25, 0
      %s28 = sadd.s32 %s27, 1
      %s29 = scalar_select %p26, %s27, %s28
      %p32 = pneg %p26
      %p33 = scmp.eq.s32.totalorder %s17, 1
      %p34 = por %p32, %p33
      %p35 = scmp.ne.s32.totalorder %s27, %s30
      %p36 = scmp.eq.s32.totalorder %s17, 0
      %p37 = por %p35, %p36
      %p38 = scmp.ne.s32.totalorder %s27, %s30
      %p39 = scmp.eq.s32.totalorder %s22, 1
      %p40 = por %p38, %p39
      %p41 = scmp.ne.s32.totalorder %s30, %s31
      %p42 = scmp.eq.s32.totalorder %s22, 0
      %p43 = por %p41, %p42
      %p44 = scmp.ne.s32.totalorder %s30, %s31
      %p45 = scmp.eq.s32.totalorder %s23, 1
      %p46 = por %p44, %p45
      %p48 = scmp.ne.s32.totalorder %s31, %s47
      %p49 = scmp.eq.s32.totalorder %s23, 0
      %p50 = por %p48, %p49
      %s52 = sadd.s32 %s51, 1
      %p55 = scmp.eq.s32.totalorder %s17, 1
      %p56 = scmp.ne.s32.totalorder %s51, %s53
      %p57 = scmp.eq.s32.totalorder %s17, 0
      %p58 = por %p56, %p57
      %p59 = scmp.ne.s32.totalorder %s51, %s53
      %p60 = scmp.eq.s32.totalorder %s22, 1
      %p61 = por %p59, %p60
      %p62 = scmp.ne.s32.totalorder %s53, %s54
      %p63 = scmp.eq.s32.totalorder %s22, 0
      %p64 = por %p62, %p63
      %p65 = scmp.ne.s32.totalorder %s53, %s54
      %p66 = scmp.eq.s32.totalorder %s23, 1
      %p67 = por %p65, %p66
      %p69 = scmp.ne.s32.totalorder %s54, %s68
      %p70 = scmp.eq.s32.totalorder %s23, 0
      %p71 = por %p69, %p70
      %s73 = sadd.s32 %s72, 1
      %p76 = scmp.eq.s32.totalorder %s17, 1
      %p77 = scmp.ne.s32.totalorder %s72, %s74
      %p78 = scmp.eq.s32.totalorder %s17, 0
      %p79 = por %p77, %p78
      %p80 = scmp.ne.s32.totalorder %s72, %s74
      %p81 = scmp.eq.s32.totalorder %s22, 1
      %p82 = por %p80, %p81
      %p83 = scmp.ne.s32.totalorder %s74, %s75
      %p84 = scmp.eq.s32.totalorder %s22, 0
      %p85 = por %p83, %p84
      %p86 = scmp.ne.s32.totalorder %s74, %s75
      %p87 = scmp.eq.s32.totalorder %s23, 1
      %p88 = por %p86, %p87
      %p90 = scmp.ne.s32.totalorder %s75, %s89
      %p91 = scmp.eq.s32.totalorder %s23, 0
      %p92 = por %p90, %p91
      %s94 = sadd.s32 %s93, 1
      %p97 = scmp.eq.s32.totalorder %s17, 1
      %p98 = scmp.ne.s32.totalorder %s93, %s95
      %p99 = scmp.eq.s32.totalorder %s17, 0
      %p100 = por %p98, %p99
      %p101 = scmp.ne.s32.totalorder %s93, %s95
      %p102 = scmp.eq.s32.totalorder %s22, 1
      %p103 = por %p101, %p102
      %p104 = scmp.ne.s32.totalorder %s95, %s96
      %p105 = scmp.eq.s32.totalorder %s22, 0
      %p106 = por %p104, %p105
      %p107 = scmp.ne.s32.totalorder %s95, %s96
      %p108 = scmp.eq.s32.totalorder %s23, 1
      %p109 = por %p107, %p108
      %p111 = scmp.ne.s32.totalorder %s96, %s110
      %p112 = scmp.eq.s32.totalorder %s23, 0
      %p113 = por %p111, %p112
      %s115 = sadd.s32 %s114, 1
      %p118 = scmp.eq.s32.totalorder %s17, 1
      %p119 = scmp.ne.s32.totalorder %s114, %s116
      %p120 = scmp.eq.s32.totalorder %s17, 0
      %p121 = por %p119, %p120
      %p122 = scmp.ne.s32.totalorder %s114, %s116
      %p123 = scmp.eq.s32.totalorder %s22, 1
      %p124 = por %p122, %p123
      %p125 = scmp.ne.s32.totalorder %s116, %s117
      %p126 = scmp.eq.s32.totalorder %s22, 0
      %p127 = por %p125, %p126
      %p128 = scmp.ne.s32.totalorder %s116, %s117
      %p129 = scmp.eq.s32.totalorder %s23, 1
      %p130 = por %p128, %p129
      %p132 = scmp.ne.s32.totalorder %s117, %s131
      %p133 = scmp.eq.s32.totalorder %s23, 0
      %p134 = por %p132, %p133
      %s136 = sadd.s32 %s135, 1
      %p139 = scmp.eq.s32.totalorder %s17, 1
      %p140 = scmp.ne.s32.totalorder %s135, %s137
      %p141 = scmp.eq.s32.totalorder %s17, 0
      %p142 = por %p140, %p141
      %p143 = scmp.ne.s32.totalorder %s135, %s137
      %p144 = scmp.eq.s32.totalorder %s22, 1
      %p145 = por %p143, %p144
      %p146 = scmp.ne.s32.totalorder %s137, %s138
      %p147 = scmp.eq.s32.totalorder %s22, 0
      %p148 = por %p146, %p147
      %p149 = scmp.ne.s32.totalorder %s137, %s138
      %p150 = scmp.eq.s32.totalorder %s23, 1
      %p151 = por %p149, %p150
      %p153 = scmp.ne.s32.totalorder %s138, %s152
      %p154 = scmp.eq.s32.totalorder %s23, 0
      %p155 = por %p153, %p154
      %s157 = sadd.s32 %s156, 1
      %p160 = scmp.eq.s32.totalorder %s17, 1
      %p161 = scmp.ne.s32.totalorder %s156, %s158
      %p162 = scmp.eq.s32.totalorder %s17, 0
      %p163 = por %p161, %p162
      %p164 = scmp.ne.s32.totalorder %s156, %s158
      %p165 = scmp.eq.s32.totalorder %s22, 1
      %p166 = por %p164, %p165
      %p167 = scmp.ne.s32.totalorder %s158, %s159
      %p168 = scmp.eq.s32.totalorder %s22, 0
      %p169 = por %p167, %p168
      %p170 = scmp.ne.s32.totalorder %s158, %s159
      %p171 = scmp.eq.s32.totalorder %s23, 1
      %p172 = por %p170, %p171
      %p174 = scmp.ne.s32.totalorder %s159, %s173
      %p175 = scmp.eq.s32.totalorder %s23, 0
      %p176 = por %p174, %p175
      %s177 = ssub.s32 %s17, %s24
      %p178 = scmp.eq.s32.totalorder %s177, 0
      %s180 = sadd.s32 %s179, 1
      %s181 = scalar_select %p178, %s179, %s180
      %p184 = pneg %p178
      %p185 = scmp.eq.s32.totalorder %s17, 1
      %p186 = por %p184, %p185
      %p187 = scmp.ne.s32.totalorder %s179, %s182
      %p188 = scmp.eq.s32.totalorder %s17, 0
      %p189 = por %p187, %p188
      %p190 = scmp.ne.s32.totalorder %s179, %s182
      %p191 = scmp.eq.s32.totalorder %s22, 1
      %p192 = por %p190, %p191
      %p193 = scmp.ne.s32.totalorder %s182, %s183
      %p194 = scmp.eq.s32.totalorder %s22, 0
      %p195 = por %p193, %p194
      %p196 = scmp.ne.s32.totalorder %s182, %s183
      %p197 = scmp.eq.s32.totalorder %s23, 1
      %p198 = por %p196, %p197
      %p200 = scmp.ne.s32.totalorder %s183, %s199
      %p201 = scmp.eq.s32.totalorder %s23, 0
      %p202 = por %p200, %p201
      %p203 = scmp.le.s32.totalorder 1, %s17
      %p204 = scmp.lt.s32.totalorder %s17, 3
      %p205 = pnand %p203, %p204
      %p206 = pneg %p205
      // Predicated region
      $region9: #{mlp_forward.1} parent=5 // pred_check
        _
      $region10: #{mlp_forward.1} parent=5 // pred_check_branch
        %208 = sbr.rel (%p205) target = $region12
      $region11: #{mlp_forward.1} parent=5 // pred_region
        %s209 = ssub.s32 %s17, 1
        // Predicated region
        $region13: #{mlp_forward.1} parent=11 // pred_check
          %p210 = pneg %p64
        $region14: #{mlp_forward.1} parent=11 // pred_check_branch
          %212 = sbr.rel (%p210) target = $region16
        $region15: #{mlp_forward.1} parent=11 // pred_region
          _
        $region16: #{mlp_forward.1} parent=11 // pred_fallthru
          _
        // Predicated region
        $region17: #{mlp_forward.1} parent=11 // pred_check
          %p213 = pneg %p85
        $region18: #{mlp_forward.1} parent=11 // pred_check_branch
          %215 = sbr.rel (%p213) target = $region20
        $region19: #{mlp_forward.1} parent=11 // pred_region
          _
        $region20: #{mlp_forward.1} parent=11 // pred_fallthru
          _
        // Predicated region
        $region21: #{mlp_forward.1} parent=11 // pred_check
          %p216 = pneg %p106
        $region22: #{mlp_forward.1} parent=11 // pred_check_branch
          %218 = sbr.rel (%p216) target = $region24
        $region23: #{mlp_forward.1} parent=11 // pred_region
          %220 = vsyncadd [#allocation3], 0
          %s221 = sshll.u32 %s3, 4
          %s222 = int_to_ptr.hbm [resolvable:$true] %s221
          %s223 = sshll.u32 [#allocation2], 4
          %s224 = int_to_ptr.vmem [resolvable:$true] %s223
          %229 = dma.hbm_to_vmem [thread:$0]  %s222, 512, %s224, [#allocation3], 128, 128, 8
        $region24: #{mlp_forward.1} parent=11 // pred_fallthru
          _
        // Predicated region
        $region25: #{mlp_forward.1} parent=11 // pred_check
          %p230 = pneg %p127
        $region26: #{mlp_forward.1} parent=11 // pred_check_branch
          %232 = sbr.rel (%p230) target = $region28
        $region27: #{mlp_forward.1} parent=11 // pred_region
          _
        $region28: #{mlp_forward.1} parent=11 // pred_fallthru
          _
        // Predicated region
        $region29: #{mlp_forward.1} parent=11 // pred_check
          %p233 = pneg %p148
        $region30: #{mlp_forward.1} parent=11 // pred_check_branch
          %235 = sbr.rel (%p233) target = $region32
        $region31: #{mlp_forward.1} parent=11 // pred_region
          _
        $region32: #{mlp_forward.1} parent=11 // pred_fallthru
          _
        // Predicated region
        $region33: #{mlp_forward.1} parent=11 // pred_check
          %p236 = pneg %p169
        $region34: #{mlp_forward.1} parent=11 // pred_check_branch
          %238 = sbr.rel (%p236) target = $region36
        $region35: #{mlp_forward.1} parent=11 // pred_region
          _
        $region36: #{mlp_forward.1} parent=11 // pred_fallthru
          _
      $region12: #{mlp_forward.1} parent=5 // pred_fallthru
        _
      %p239 = scmp.lt.s32.totalorder %s17, 2
      // Predicated region
      $region37: #{mlp_forward.1} parent=5 // pred_check
        %p240 = pneg %p239
      $region38: #{mlp_forward.1} parent=5 // pred_check_branch
        %242 = sbr.rel (%p240) target = $region40
      $region39: #{mlp_forward.1} parent=5 // pred_region
        // Predicated region
        $region41: #{mlp_forward.1} parent=39 // pred_check
          %p243 = pneg %p37
        $region42: #{mlp_forward.1} parent=39 // pred_check_branch
          %245 = sbr.rel (%p243) target = $region44
        $region43: #{mlp_forward.1} parent=39 // pred_region
          %p246 = scmp.lt.s32.totalorder %s17, 1
          %s247 = scalar_select %p246, %s17, 1
          %s248 = smul.addr %s247, 8
          %s249 = scalar_lea.vmem %s0, %s248
        $region44: #{mlp_forward.1} parent=39 // pred_fallthru
          _
      $region40: #{mlp_forward.1} parent=5 // pred_fallthru
        _
      %p250 = scmp.le.s32.totalorder 1, %s17
      %p251 = scmp.lt.s32.totalorder %s17, 3
      %p252 = pnand %p250, %p251
      %p253 = pneg %p252
      // Predicated region
      $region45: #{mlp_forward.1} parent=5 // pred_check
        _
      $region46: #{mlp_forward.1} parent=5 // pred_check_branch
        %255 = sbr.rel (%p252) target = $region48
      $region47: #{mlp_forward.1} parent=5 // pred_region
        %s256 = ssub.s32 %s17, 1
        // Predicated region
        $region49: #{mlp_forward.1} parent=47 // pred_check
          %p257 = pneg %p106
        $region50: #{mlp_forward.1} parent=47 // pred_check_branch
          %259 = sbr.rel (%p257) target = $region52
        $region51: #{mlp_forward.1} parent=47 // pred_region
          %261 = dma.done [#allocation3], 512
        $region52: #{mlp_forward.1} parent=47 // pred_fallthru
          _
        %p262 = scmp.lt.s32.totalorder %s22, 1
        %s263 = scalar_select %p262, %s22, 1
        %s264 = smul.addr %s263, 8
        %s265 = scalar_lea.vmem %s0, %s264
        %p266 = pneg %p43
        %p267 = pneg %p40
        %p268 = pneg %p64
        %p269 = pneg %p61
        %p270 = pneg %p85
        %p271 = pneg %p82
        %p272 = pneg %p106
        %p273 = pneg %p103
        %p274 = pneg %p127
        %p275 = pneg %p124
        %p276 = pneg %p148
        %p277 = pneg %p145
        %p278 = pneg %p169
        %p279 = pneg %p166
        %p280 = pneg %p195
        %p281 = pneg %p192
        %s282 = sand.u32 %s182, 1
        %s283 = scalar_lea.sflag [#allocation4], %s282
        %s284 = sand.u32 %s182, 1
        %s285 = smul.addr %s284, 8
        %s286 = scalar_lea.vmem [#allocation5], %s285
        %p287 = scmp.lt.s32.totalorder %s22, 1
        %s288 = scalar_select %p287, %s22, 1
        %s289 = smul.addr %s288, 8
        %s290 = scalar_lea.vmem %s0, %s289
        %v291 = vld [vmem:[%s290] sm:$0xff]
        %v292 = vld [vmem:[%s1] sm:$0xff]
        %v293 = vld [vmem:[%s1 + $0x8] sm:$0xff]
        %v294 = vld [vmem:[%s1 + $0x10] sm:$0xff]
        %v295 = vld [vmem:[%s1 + $0x18] sm:$0xff]
        %v296 = vld [vmem:[%s2] sm:$0x1]
        %v298 = vperm.slane %v296, 0
        %vm300 = vcmask 261120
        %v302 = vsel %vm300, %v291, 0
        %304 = vmatpush.msra.mxu0 0.0
        %305 = vmatpush.msra.mxu0 0.0
        %306 = vmatpush.msra.mxu0 0.0
        %307 = vmatpush.msra.mxu0 0.0
        %308 = vmatpush.msra.mxu0 0.0
        %309 = vmatpush.msra.mxu0 0.0
        %310 = vmatpush.msra.mxu0 0.0
        %311 = vmatpush.msra.mxu0 0.0
        %312 = vmatpush.msra.mxu0 0.0
        %313 = vmatpush.msra.mxu0 0.0
        %314 = vmatpush.msra.mxu0 0.0
        %315 = vmatpush.msra.mxu0 0.0
        %316 = vmatpush.msra.mxu0 %v295
        %317 = vmatpush.msra.mxu0 %v294
        %318 = vmatpush.msra.mxu0 %v293
        %319 = vmatpush.msra.mxu0 %v292
        %320 = vmatmul.f32.gmra.mxu0 %v302
        %v321 = vpop.f32.mrf.mxu0
        %v322 = vadd.f32 %v298, %v321
        %323 = vdwg.mxu0
        %v324 = vmax.f32 %v322, 0.0
        %v325 = vld [vmem:[#allocation2] sm:$0xff]
        %v326 = vld [vmem:[#allocation2 + $0x8] sm:$0xff]
        %v327 = vld [vmem:[#allocation2 + $0x10] sm:$0xff]
        %v328 = vld [vmem:[#allocation2 + $0x18] sm:$0xff]
        %v329 = vld [vmem:[%s4] sm:$0x1]
        %v331 = vperm.slane %v329, 0
        %v334 = vsel %vm300, %v324, 0
        %336 = vmatpush.msra.mxu0 0.0
        %337 = vmatpush.msra.mxu0 0.0
        %338 = vmatpush.msra.mxu0 0.0
        %339 = vmatpush.msra.mxu0 0.0
        %340 = vmatpush.msra.mxu0 0.0
        %341 = vmatpush.msra.mxu0 0.0
        %342 = vmatpush.msra.mxu0 0.0
        %343 = vmatpush.msra.mxu0 0.0
        %344 = vmatpush.msra.mxu0 0.0
        %345 = vmatpush.msra.mxu0 0.0
        %346 = vmatpush.msra.mxu0 0.0
        %347 = vmatpush.msra.mxu0 0.0
        %348 = vmatpush.msra.mxu0 %v328
        %349 = vmatpush.msra.mxu0 %v327
        %350 = vmatpush.msra.mxu0 %v326
        %351 = vmatpush.msra.mxu0 %v325
        %352 = vmatmul.f32.gmra.mxu0 %v334
        %v353 = vpop.f32.mrf.mxu0
        %v354 = vadd.f32 %v331, %v353
        %355 = vdwg.mxu0
        %v356 = vmax.f32 %v354, 0.0
        %v357 = vld [vmem:[%s5] sm:$0xff]
        %v358 = vld [vmem:[%s5 + $0x8] sm:$0xff]
        %v359 = vld [vmem:[%s5 + $0x10] sm:$0xff]
        %v360 = vld [vmem:[%s5 + $0x18] sm:$0xff]
        %v361 = vld [vmem:[%s6] sm:$0x1]
        %v363 = vperm.slane %v361, 0
        %v366 = vsel %vm300, %v356, 0
        %368 = vmatpush.msra.mxu0 0.0
        %369 = vmatpush.msra.mxu0 0.0
        %370 = vmatpush.msra.mxu0 0.0
        %371 = vmatpush.msra.mxu0 0.0
        %372 = vmatpush.msra.mxu0 0.0
        %373 = vmatpush.msra.mxu0 0.0
        %374 = vmatpush.msra.mxu0 0.0
        %375 = vmatpush.msra.mxu0 0.0
        %376 = vmatpush.msra.mxu0 0.0
        %377 = vmatpush.msra.mxu0 0.0
        %378 = vmatpush.msra.mxu0 0.0
        %379 = vmatpush.msra.mxu0 0.0
        %380 = vmatpush.msra.mxu0 %v360
        %381 = vmatpush.msra.mxu0 %v359
        %382 = vmatpush.msra.mxu0 %v358
        %383 = vmatpush.msra.mxu0 %v357
        %384 = vmatmul.f32.gmra.mxu0 %v366
        %v385 = vpop.f32.mrf.mxu0
        %v386 = vadd.f32 %v363, %v385
        %387 = vdwg.mxu0
        %vm388 = vcmask 130048
        %389 = vst.msk [vmem:[%s286] sm:$0xff] %vm388, %v386
        %s390 = sand.u32 %s182, 1
        %s391 = scalar_lea.sflag [#allocation4], %s390
        %s392 = sand.u32 %s182, 1
        %s393 = smul.addr %s392, 8
        %s394 = scalar_lea.vmem [#allocation5], %s393
        // Predicated region
        $region53: #{mlp_forward.1} parent=47 // pred_check
          %p395 = pneg %p192
        $region54: #{mlp_forward.1} parent=47 // pred_check_branch
          %397 = sbr.rel (%p395) target = $region56
        $region55: #{mlp_forward.1} parent=47 // pred_region
          %399 = vsyncadd %s391, 0
          %s400 = smul.addr %s22, 8
          %s401 = scalar_lea.hbm %s7, %s400
          %s403 = sshll.u32 %s394, 4
          %s404 = int_to_ptr.vmem [resolvable:$true] %s403
          %s405 = sshll.u32 %s401, 4
          %s406 = int_to_ptr.hbm [resolvable:$true] %s405
          %408 = dma.vmem_to_hbm [thread:$0]  %s404, 128, %s406, %s391
        $region56: #{mlp_forward.1} parent=47 // pred_fallthru
          _
      $region48: #{mlp_forward.1} parent=5 // pred_fallthru
        _
      %p409 = scmp.le.s32.totalorder 2, %s17
      // Predicated region
      $region57: #{mlp_forward.1} parent=5 // pred_check
        %p410 = pneg %p409
      $region58: #{mlp_forward.1} parent=5 // pred_check_branch
        %412 = sbr.rel (%p410) target = $region60
      $region59: #{mlp_forward.1} parent=5 // pred_region
        %s413 = ssub.s32 %s17, 2
        // Predicated region
        $region61: #{mlp_forward.1} parent=59 // pred_check
          %p414 = pneg %p198
        $region62: #{mlp_forward.1} parent=59 // pred_check_branch
          %416 = sbr.rel (%p414) target = $region64
        $region63: #{mlp_forward.1} parent=59 // pred_region
          %s417 = sand.u32 %s183, 1
          %s418 = scalar_lea.sflag [#allocation4], %s417
          %s419 = sand.u32 %s183, 1
          %s420 = smul.addr %s419, 8
          %s421 = scalar_lea.vmem [#allocation5], %s420
          %423 = dma.done %s418, 128
        $region64: #{mlp_forward.1} parent=59 // pred_fallthru
          _
      $region60: #{mlp_forward.1} parent=5 // pred_fallthru
        _
    $region6: #{mlp_forward.1} parent=1 // loop_footer
      %s21 = sadd.s32 1, %s17
    $region7: #{mlp_forward.1} parent=1 // loop_footer_branch
      %16 = sbr.rel target = $region3
    $region8: #{mlp_forward.1} parent=1 // loop_exit
      _
    %424 = vsyncpa [#allocation3], 1
    %s425 = scalar_lea.sflag [#allocation3], 1
    %426 = vsyncpa %s425, 1
    %427 = vsyncpa [#allocation4], 1
    %s428 = scalar_lea.sflag [#allocation4], 1
    %429 = vsyncpa %s428, 1

</llo_original>
